<compile_context>
chip_gen: v7x
topology: tpu7x:2x2x1
jax: 0.10.0
libtpu: 0.0.40
codegen_flags: <defaults>
</compile_context>

<pallas_src>
import jax
import jax.numpy as jnp
from jax.experimental import pallas as pl
from jax.experimental.pallas import tpu as pltpu


_TARGET_BLOCK_BYTES = 3 * 1024 * 1024   # ~3 MiB image block: in+out double-buffered
                                        # ~= 12 MiB -> fits v5e's 16 MiB default
                                        # scoped VMEM, ample headroom on v6e/v7x.
_LANE_CANDIDATES = (2048, 1024, 512, 256, 128)


def _divisors(n):
    return [d for d in range(1, n + 1) if n % d == 0]


def _sublane_multiple(itemsize):
    # minimum second-minor tile: 8 for f32, 16 for bf16, 32 for int8/fp8
    return max(8, 32 // max(1, itemsize))


def _pick_layout(hw, itemsize):
    """Lane-dense (lane, nrows) view of the flattened H*W pixels.

    Prefer the widest lane that divides hw exactly while keeping the row count
    a multiple of the sublane tile (fully dense, zero padding); else fall back
    to the narrowest dividing lane (maximises rows, minimises sublane padding);
    only pad hw when nothing divides.
    """
    sub = _sublane_multiple(itemsize)
    lane = None
    for cand in _LANE_CANDIDATES:                       # widest first
        if hw % cand == 0 and (hw // cand) % sub == 0:
            lane = cand
            break
    if lane is None:
        for cand in reversed(_LANE_CANDIDATES):         # narrowest first
            if hw % cand == 0:
                lane = cand
                break
    if lane is None:
        lane = 128                                      # minimal padding needed
    nrows = pl.cdiv(hw, lane)
    return lane, nrows


def _pick_tiling(n_images, nrows, lane, itemsize):
    """Return (G images per block, R rows per block, number of row tiles)."""
    sub = _sublane_multiple(itemsize)
    row_bytes = 3 * lane * itemsize                     # one spatial row, 3 channels
    image_bytes = nrows * row_bytes

    if image_bytes > _TARGET_BLOCK_BYTES:
        # Large image: one image per step, tile the spatial rows.
        rows_cap = max(sub, (_TARGET_BLOCK_BYTES // row_bytes) // sub * sub)
        divs = [d for d in _divisors(nrows) if d % sub == 0 and d <= rows_cap]
        r = max(divs) if divs else rows_cap             # ragged last tile if no divisor
        return 1, r, pl.cdiv(nrows, r)

    # Small images: whole image per block, pack G images per grid step.
    g = 1
    for d in _divisors(n_images):
        if d * image_bytes <= _TARGET_BLOCK_BYTES:
            g = d
    # Keep >= 2 grid steps whenever possible so both v7x TensorCores get work.
    if g == n_images and n_images > 1:
        g = max(d for d in _divisors(n_images) if d <= n_images // 2)
    return g, nrows, 1


def _coloring_kernel(img_ref, col_ref, out_ref):
    # img_ref / out_ref: (G*3, R, LANE) blocks of the flattened images.
    # col_ref:           (G, 6, 1)  = per-image [fg_r, fg_g, fg_b, bg_r, bg_g, bg_b].
    g3, r, lane = img_ref.shape
    g = g3 // 3
    img = img_ref[...].reshape(g, 3, r, lane)             # leading-dim split: free
    # background := all 3 channels > 0.9 (native-dtype compare; no f32 upcast copy)
    bg_mask = (img[:, 0] > 0.9) & (img[:, 1] > 0.9) & (img[:, 2] > 0.9)   # (g, r, lane)
    col = col_ref[...]                                     # (g, 6, 1)
    planes = []
    for c in range(3):
        fg_c = col[:, c:c + 1, :]                          # (g, 1, 1)
        bg_c = col[:, 3 + c:4 + c, :]                      # (g, 1, 1)
        planes.append(jnp.where(bg_mask, bg_c, fg_c))      # (g, r, lane)
    out = jnp.stack(planes, axis=1)                        # (g, 3, r, lane)
    out_ref[...] = out.reshape(g3, r, lane).astype(out_ref.dtype)


def random_coloring_batch(images, fg_colors, bg_colors):
    """images: (N, 3, H, W); fg_colors/bg_colors: (N, 3). Returns (N, 3, H, W)."""
    N, C, H, W = images.shape
    assert C == 3, "RandomColoring expects 3-channel images"
    dtype = images.dtype
    itemsize = jnp.dtype(dtype).itemsize
    hw = H * W

    lane, nrows = _pick_layout(hw, itemsize)
    padded = nrows * lane
    G, R, row_tiles = _pick_tiling(N, nrows, lane, itemsize)

    # Lane-dense view of the pixels. Padding (and the matching output slice)
    # only happens when H*W is not a multiple of `lane`; otherwise no extra
    # pad/slice pass is introduced.
    flat = images.reshape(N * 3, hw)
    if padded != hw:
        flat = jnp.pad(flat, ((0, 0), (0, padded - hw)))
    flat = flat.reshape(N * 3, nrows, lane)

    # One fused, tiny color operand: 6 scalars per image, broadcast in-kernel.
    cols = jnp.concatenate([fg_colors, bg_colors], axis=1).astype(dtype)   # (N, 6)
    cols = cols.reshape(N, 6, 1)

    grid = (N // G, row_tiles)

    out = pl.pallas_call(
        _coloring_kernel,
        out_shape=jax.ShapeDtypeStruct((N * 3, nrows, lane), dtype),
        grid_spec=pltpu.PrefetchScalarGridSpec(
            num_scalar_prefetch=0,
            grid=grid,
            in_specs=[
                pl.BlockSpec((G * 3, R, lane), lambda n, i: (n, i, 0)),
                # Colors: block index is constant along the row-tile axis, so the
                # tiny DMA happens once per image group, not once per grid step.
                pl.BlockSpec((G, 6, 1), lambda n, i: (n, 0, 0)),
            ],
            out_specs=pl.BlockSpec((G * 3, R, lane), lambda n, i: (n, i, 0)),
        ),
        compiler_params=pltpu.CompilerParams(
            dimension_semantics=("parallel", "parallel"),
            vmem_limit_bytes=48 * 1024 * 1024,
        ),
    )(flat, cols)

    if padded != hw:
        out = out.reshape(N * 3, padded)[:, :hw]
    return out.reshape(N, 3, H, W)


def random_coloring(image, fg_color, bg_color):
    """Single image (3, H, W) -> (3, H, W), matching the module's forward."""
    return random_coloring_batch(image[None], fg_color[None], bg_color[None])[0]


def generate_colors(key):
    """Deterministic equivalent of the module's color sampling:
    pick fg color, then resample bg color until ||fg - bg|| >= 0.5."""
    # TODO(synk): host-side Python while-loop (like the PyTorch module's random.random()
    # rejection sampling); not jit/vmap-able, kept outside the kernel.
    key, k_fg = jax.random.split(key)
    fg = jax.random.uniform(k_fg, (3,), dtype=jnp.float32)
    while True:
        key, k_bg = jax.random.split(key)
        bg = jax.random.uniform(k_bg, (3,), dtype=jnp.float32)
        if float(jnp.linalg.norm(fg - bg)) >= 0.5:
            break
    return fg, bg


def _reference(image, fg, bg):
    bg_mask = jnp.all(image > 0.9, axis=0)
    return jnp.where(bg_mask[None, :, :], bg[:, None, None],
                     fg[:, None, None]).astype(image.dtype)


if __name__ == "__main__":
    key = jax.random.PRNGKey(0)
    k_img, k_col, k_batch, k_mnist, k_big = jax.random.split(key, 5)

    # 1) single CIFAR-sized image (3, 32, 32) -- module's forward semantics
    H, W = 32, 32
    image = jax.random.uniform(k_img, (3, H, W), dtype=jnp.float32, maxval=0.8)
    image = image.at[:, :8, :8].set(0.95)                 # white patch -> background
    fg, bg = generate_colors(k_col)
    out = jax.block_until_ready(random_coloring(image, fg, bg))
    ref = _reference(image, fg, bg)
    assert out.shape == (3, H, W)
    assert jnp.allclose(out, ref, atol=1e-6), "single-image mismatch vs reference"

    # 2) batch of tiny images (4, 3, 16, 16): exercises image-grouping + megacore path
    N, Hb, Wb = 4, 16, 16
    imgs = jax.random.uniform(k_batch, (N, 3, Hb, Wb), dtype=jnp.float32, maxval=0.8)
    imgs = imgs.at[:, :, :4, :4].set(0.95)
    fgs, bgs = [], []
    kk = k_col
    for _ in range(N):
        kk, sub = jax.random.split(kk)
        f, b = generate_colors(sub)
        fgs.append(f)
        bgs.append(b)
    fgs = jnp.stack(fgs)
    bgs = jnp.stack(bgs)
    outs = jax.block_until_ready(random_coloring_batch(imgs, fgs, bgs))
    refs = jnp.stack([_reference(imgs[n], fgs[n], bgs[n]) for n in range(N)])
    assert outs.shape == (N, 3, Hb, Wb)
    assert jnp.allclose(outs, refs, atol=1e-6), "tiny-batch mismatch vs reference"

    # 3) MNIST-shaped batch (2, 3, 28, 28): exercises the minimal-pad path
    Nm = 2
    m_imgs = jax.random.uniform(k_mnist, (Nm, 3, 28, 28), dtype=jnp.float32, maxval=0.8)
    m_imgs = m_imgs.at[:, :, :6, :6].set(0.95)
    m_fg = jnp.stack([fg, bg])
    m_bg = jnp.stack([bg, fg])
    m_out = jax.block_until_ready(random_coloring_batch(m_imgs, m_fg, m_bg))
    m_ref = jnp.stack([_reference(m_imgs[n], m_fg[n], m_bg[n]) for n in range(Nm)])
    assert jnp.allclose(m_out, m_ref, atol=1e-6), "mnist-batch mismatch vs reference"

    # 4) one larger image (3, 384, 1024): exercises the row-tiled large-image path
    big = jax.random.uniform(k_big, (3, 384, 1024), dtype=jnp.float32, maxval=0.8)
    big = big.at[:, :32, :256].set(0.95)
    b_out = jax.block_until_ready(random_coloring(big, fg, bg))
    b_ref = _reference(big, fg, bg)
    assert jnp.allclose(b_out, b_ref, atol=1e-6), "large-image mismatch vs reference"

    print("KERNEL_OK")
</pallas_src>

<mosaic_0001>
module attributes {stable_mosaic.version = 11 : i64} {
  func.func @_coloring_kernel(%arg0: i32, %arg1: i32, %arg2: memref<3x8x128xf32, #tpu.memory_space<vmem>>, %arg3: memref<1x6x1xf32, #tpu.memory_space<vmem>>, %arg4: memref<3x8x128xf32, #tpu.memory_space<vmem>>) attributes {dimension_semantics = [#tpu.dimension_semantics<parallel>, #tpu.dimension_semantics<parallel>], iteration_bounds = array<i64: 1, 1>, scalar_prefetch = 0 : i64, scratch_operands = 0 : i64, tpu.core_type = #tpu.core_type<tc>, window_params = [{transform_indices = @transform_0, window_bounds = array<i64: 3, 8, 128>}, {transform_indices = @transform_1, window_bounds = array<i64: 1, 6, 1>}, {transform_indices = @transform_2, window_bounds = array<i64: 3, 8, 128>}]} {
    %c0 = arith.constant 0 : index
    %c0_0 = arith.constant 0 : index
    %c0_1 = arith.constant 0 : index
    %0 = vector.load %arg2[%c0, %c0_0, %c0_1] : memref<3x8x128xf32, #tpu.memory_space<vmem>>, vector<3x8x128xf32>
    %1 = vector.shape_cast %0 : vector<3x8x128xf32> to vector<1x3x8x128xf32>
    %2 = vector.extract_strided_slice %1 {offsets = [0, 0, 0, 0], sizes = [1, 1, 8, 128], strides = [1, 1, 1, 1]} : vector<1x3x8x128xf32> to vector<1x1x8x128xf32>
    %3 = vector.shape_cast %2 : vector<1x1x8x128xf32> to vector<1x8x128xf32>
    %cst = arith.constant 0.899999976 : f32
    %4 = vector.broadcast %cst : f32 to vector<1x8x128xf32>
    %5 = arith.cmpf ogt, %3, %4 : vector<1x8x128xf32>
    %6 = vector.extract_strided_slice %1 {offsets = [0, 1, 0, 0], sizes = [1, 1, 8, 128], strides = [1, 1, 1, 1]} : vector<1x3x8x128xf32> to vector<1x1x8x128xf32>
    %7 = vector.shape_cast %6 : vector<1x1x8x128xf32> to vector<1x8x128xf32>
    %cst_2 = arith.constant 0.899999976 : f32
    %8 = vector.broadcast %cst_2 : f32 to vector<1x8x128xf32>
    %9 = arith.cmpf ogt, %7, %8 : vector<1x8x128xf32>
    %10 = arith.andi %5, %9 : vector<1x8x128xi1>
    %11 = vector.extract_strided_slice %1 {offsets = [0, 2, 0, 0], sizes = [1, 1, 8, 128], strides = [1, 1, 1, 1]} : vector<1x3x8x128xf32> to vector<1x1x8x128xf32>
    %12 = vector.shape_cast %11 : vector<1x1x8x128xf32> to vector<1x8x128xf32>
    %cst_3 = arith.constant 0.899999976 : f32
    %13 = vector.broadcast %cst_3 : f32 to vector<1x8x128xf32>
    %14 = arith.cmpf ogt, %12, %13 : vector<1x8x128xf32>
    %15 = arith.andi %10, %14 : vector<1x8x128xi1>
    %c0_4 = arith.constant 0 : index
    %c0_5 = arith.constant 0 : index
    %c0_6 = arith.constant 0 : index
    %16 = vector.load %arg3[%c0_4, %c0_5, %c0_6] : memref<1x6x1xf32, #tpu.memory_space<vmem>>, vector<1x6x1xf32>
    %17 = vector.extract_strided_slice %16 {offsets = [0, 0, 0], sizes = [1, 1, 1], strides = [1, 1, 1]} : vector<1x6x1xf32> to vector<1x1x1xf32>
    %18 = vector.extract_strided_slice %16 {offsets = [0, 3, 0], sizes = [1, 1, 1], strides = [1, 1, 1]} : vector<1x6x1xf32> to vector<1x1x1xf32>
    %19 = vector.shape_cast %18 : vector<1x1x1xf32> to vector<1x1x1xf32>
    %20 = vector.broadcast %19 : vector<1x1x1xf32> to vector<1x8x128xf32>
    %21 = vector.shape_cast %17 : vector<1x1x1xf32> to vector<1x1x1xf32>
    %22 = vector.broadcast %21 : vector<1x1x1xf32> to vector<1x8x128xf32>
    %23 = arith.select %15, %20, %22 : vector<1x8x128xi1>, vector<1x8x128xf32>
    %24 = vector.extract_strided_slice %16 {offsets = [0, 1, 0], sizes = [1, 1, 1], strides = [1, 1, 1]} : vector<1x6x1xf32> to vector<1x1x1xf32>
    %25 = vector.extract_strided_slice %16 {offsets = [0, 4, 0], sizes = [1, 1, 1], strides = [1, 1, 1]} : vector<1x6x1xf32> to vector<1x1x1xf32>
    %26 = vector.shape_cast %25 : vector<1x1x1xf32> to vector<1x1x1xf32>
    %27 = vector.broadcast %26 : vector<1x1x1xf32> to vector<1x8x128xf32>
    %28 = vector.shape_cast %24 : vector<1x1x1xf32> to vector<1x1x1xf32>
    %29 = vector.broadcast %28 : vector<1x1x1xf32> to vector<1x8x128xf32>
    %30 = arith.select %15, %27, %29 : vector<1x8x128xi1>, vector<1x8x128xf32>
    %31 = vector.extract_strided_slice %16 {offsets = [0, 2, 0], sizes = [1, 1, 1], strides = [1, 1, 1]} : vector<1x6x1xf32> to vector<1x1x1xf32>
    %32 = vector.extract_strided_slice %16 {offsets = [0, 5, 0], sizes = [1, 1, 1], strides = [1, 1, 1]} : vector<1x6x1xf32> to vector<1x1x1xf32>
    %33 = vector.shape_cast %32 : vector<1x1x1xf32> to vector<1x1x1xf32>
    %34 = vector.broadcast %33 : vector<1x1x1xf32> to vector<1x8x128xf32>
    %35 = vector.shape_cast %31 : vector<1x1x1xf32> to vector<1x1x1xf32>
    %36 = vector.broadcast %35 : vector<1x1x1xf32> to vector<1x8x128xf32>
    %37 = arith.select %15, %34, %36 : vector<1x8x128xi1>, vector<1x8x128xf32>
    %38 = vector.shape_cast %23 : vector<1x8x128xf32> to vector<1x1x8x128xf32>
    %39 = vector.shape_cast %30 : vector<1x8x128xf32> to vector<1x1x8x128xf32>
    %40 = vector.shape_cast %37 : vector<1x8x128xf32> to vector<1x1x8x128xf32>
    %41 = tpu.concatenate %38, %39, %40 in 1 : vector<1x1x8x128xf32>, vector<1x1x8x128xf32>, vector<1x1x8x128xf32> -> vector<1x3x8x128xf32>
    %42 = vector.shape_cast %41 : vector<1x3x8x128xf32> to vector<3x8x128xf32>
    %c0_7 = arith.constant 0 : index
    %c0_8 = arith.constant 0 : index
    %c0_9 = arith.constant 0 : index
    %43 = vector.load %arg4[%c0_7, %c0_8, %c0_9] : memref<3x8x128xf32, #tpu.memory_space<vmem>>, vector<3x8x128xf32>
    tpu.vector_store %arg4[%c0_7, %c0_8, %c0_9], %42 {strides = array<i32>} : memref<3x8x128xf32, #tpu.memory_space<vmem>>, vector<3x8x128xf32>,
    return
  }
  func.func @transform_0(%arg0: i32, %arg1: i32) -> (i32, i32, i32) {
    %c0_i32 = arith.constant 0 : i32
    %c0_i32_0 = arith.constant 0 : i32
    return %arg0, %arg1, %c0_i32 : i32, i32, i32
  }
  func.func @transform_1(%arg0: i32, %arg1: i32) -> (i32, i32, i32) {
    %c0_i32 = arith.constant 0 : i32
    %c0_i32_0 = arith.constant 0 : i32
    %c0_i32_1 = arith.constant 0 : i32
    return %arg0, %c0_i32, %c0_i32_0 : i32, i32, i32
  }
  func.func @transform_2(%arg0: i32, %arg1: i32) -> (i32, i32, i32) {
    %c0_i32 = arith.constant 0 : i32
    %c0_i32_0 = arith.constant 0 : i32
    return %arg0, %arg1, %c0_i32 : i32, i32, i32
  }
}

</mosaic_0001>

<llo_original>
// kernel: tpu_custom_call.1
$region0: #{tpu_custom_call.1}
  #allocation0 [shape = 'u32[]', space=smem, size = 0x4, offset = 0x4, fixed_abs, tag = 'smem constant byte address 0x4 - core index']
  #allocation1 [shape = 'u32[144,128]{1,0:T(1,128)}', space=vmem, size = 0x12000, scoped, tag = 'internal scratch']
  %s0 = inlined_call_operand.hbm [shape: f32[3,8,128], index: 0, kind: input, shape index: {}]
  %s1 = inlined_call_operand.vmem [shape: f32[1,6,1], index: 1, kind: input, shape index: {}]
  %s2 = inlined_call_operand.hbm [shape: f32[3,8,128], index: 2, kind: output, shape index: {}]
  %s3 = sld [smem:[#allocation0]]
  $region22: #{tpu_custom_call.1} parent=0
    _
  %s5 = ssub.s32 1, %s3
  %s6 = scalar_select 0, %s5, %s3
  $region1: #{tpu_custom_call.1} parent=0
    #allocation2 [shape = 'u8[12288]{0}', space=vmem, size = 0x3000, scoped, tag = 'input window, operand 0, single buffered']
    #allocation3 [shape = 's32[1]{0}', space=sflag, size = 0x4, scoped, tag = 'scoped memory for tpu_custom_call.1']
    #allocation4 [shape = 's32[1]{0}', space=sflag, size = 0x4, scoped, tag = 'scoped memory for tpu_custom_call.1']
    #allocation5 [shape = 'u8[12288]{0}', space=vmem, size = 0x3000, scoped, tag = 'output window, operand 0, single buffered']
    %7 = vsyncpa [#allocation3], 0
    %8 = vsyncpa [#allocation4], 0
    // Predicated region
    $region2: #{tpu_custom_call.1} parent=1 // pred_check
      _
    $region3: #{tpu_custom_call.1} parent=1 // pred_check_branch
      %10 = sbr.rel (0) target = $region5
    $region4: #{tpu_custom_call.1} parent=1 // pred_region
      %s12 = ssub.s32 384, 384
      %13 = vsyncadd [#allocation3], %s12
      %s14 = sshll.u32 [#allocation2], 4
      %s15 = int_to_ptr.vmem [resolvable:$true] %s14
      %20 = dma.hbm_to_vmem [thread:$0]  %s0, 384, %s15, [#allocation3], 128, 128, 8
    $region5: #{tpu_custom_call.1} parent=1 // pred_fallthru
      _
    // Predicated region
    $region6: #{tpu_custom_call.1} parent=1 // pred_check
      _
    $region7: #{tpu_custom_call.1} parent=1 // pred_check_branch
      %22 = sbr.rel (0) target = $region9
    $region8: #{tpu_custom_call.1} parent=1 // pred_region
      _
    $region9: #{tpu_custom_call.1} parent=1 // pred_fallthru
      _
    // Predicated region
    $region10: #{tpu_custom_call.1} parent=1 // pred_check
      _
    $region11: #{tpu_custom_call.1} parent=1 // pred_check_branch
      %24 = sbr.rel (0) target = $region13
    $region12: #{tpu_custom_call.1} parent=1 // pred_region
      %25 = dma.done [#allocation3], 384
    $region13: #{tpu_custom_call.1} parent=1 // pred_fallthru
      _
    %v26 = vld [vmem:[#allocation2] sm:$0xff]
    %v27 = vld [vmem:[#allocation2 + $0x8] sm:$0xff]
    %v28 = vld [vmem:[#allocation2 + $0x10] sm:$0xff]
    %vm29 = vcmp.gt.f32.partialorder %v26, 0.9
    %vm30 = vcmp.gt.f32.partialorder %v27, 0.9
    %vm31 = vmand %vm29, %vm30
    %vm32 = vcmp.gt.f32.partialorder %v28, 0.9
    %vm33 = vmand %vm31, %vm32
    %v34 = vld [vmem:[%s1] sm:$0x3f]
    %v36 = vrot.slane %v34, 3
    %s37 = vtos %v36
    %v38 = vstv %s37
    %s40 = vtos %v34
    %v41 = vstv %s40
    %v43 = vsel %vm33, %v38, %v41
    %v44 = vrot.slane %v34, 4
    %s45 = vtos %v44
    %v46 = vstv %s45
    %v48 = vrot.slane %v34, 1
    %s49 = vtos %v48
    %v50 = vstv %s49
    %v52 = vsel %vm33, %v46, %v50
    %v53 = vrot.slane %v34, 5
    %s54 = vtos %v53
    %v55 = vstv %s54
    %v57 = vrot.slane %v34, 2
    %s58 = vtos %v57
    %v59 = vstv %s58
    %v61 = vsel %vm33, %v55, %v59
    %62 = vst [vmem:[#allocation5] sm:$0xff] %v43
    %63 = vst [vmem:[#allocation5 + $0x8] sm:$0xff] %v52
    %64 = vst [vmem:[#allocation5 + $0x10] sm:$0xff] %v61
    // Predicated region
    $region14: #{tpu_custom_call.1} parent=1 // pred_check
      _
    $region15: #{tpu_custom_call.1} parent=1 // pred_check_branch
      %66 = sbr.rel (0) target = $region17
    $region16: #{tpu_custom_call.1} parent=1 // pred_region
      %s68 = ssub.s32 384, 384
      %69 = vsyncadd [#allocation4], %s68
      %s70 = sshll.u32 [#allocation5], 4
      %s71 = int_to_ptr.vmem [resolvable:$true] %s70
      %76 = dma.vmem_to_hbm [thread:$0]  %s71, 384, %s2, [#allocation4], 128, 128, 8
    $region17: #{tpu_custom_call.1} parent=1 // pred_fallthru
      _
    // Predicated region
    $region18: #{tpu_custom_call.1} parent=1 // pred_check
      _
    $region19: #{tpu_custom_call.1} parent=1 // pred_check_branch
      %78 = sbr.rel (0) target = $region21
    $region20: #{tpu_custom_call.1} parent=1 // pred_region
      %79 = dma.done [#allocation4], 384
    $region21: #{tpu_custom_call.1} parent=1 // pred_fallthru
      _
    %80 = vsyncpa [#allocation3], 1
    %81 = vsyncpa [#allocation4], 1

</llo_original>
